<compile_context>
chip_gen: v7x
topology: tpu7x:2x2x1
jax: 0.10.0
libtpu: 0.0.40
codegen_flags: <defaults>
</compile_context>

<pallas_src>
import jax
import jax.numpy as jnp
from jax.experimental import pallas as pl
from jax.experimental.pallas import tpu as pltpu


def _round_up(x, m):
    return ((x + m - 1) // m) * m


# --------------------------------------------------------------------------- #
# Kernel: three fused dense+tanh layers on one batch tile.
# --------------------------------------------------------------------------- #
def actor_kernel(x_ref, w1_ref, b1_ref, w2_ref, b2_ref, w3_ref, b3_ref, out_ref):
    mm_dtype = w1_ref.dtype  # weights were cast once in prepare_params

    def dense_tanh(a, w_ref, b_ref):
        # MXU matmul with f32 accumulate; bias add + tanh in f32 (EUP tanh).
        y = jnp.dot(a.astype(mm_dtype), w_ref[...],
                    preferred_element_type=jnp.float32)
        return jnp.tanh(y + b_ref[...])

    x = x_ref[...].astype(jnp.float32)
    t1 = dense_tanh(x, w1_ref, b1_ref)    # == 2*sigmoid(fc1(x)) - 1 (folded)
    t2 = dense_tanh(t1, w2_ref, b2_ref)   # == 2*sigmoid(fc2(h1)) - 1 (folded)
    mu = dense_tanh(t2, w3_ref, b3_ref)   # == tanh(fc3(h2))
    out_ref[...] = mu.astype(out_ref.dtype)


# --------------------------------------------------------------------------- #
# One-time parameter preparation (hoisted out of the forward path).
# --------------------------------------------------------------------------- #
def prepare_params(params, *, matmul_dtype=jnp.float32, lane_pad=128):
    """Fold sigmoid affine constants into weights, lane-pad the output layer,
    and cast weights (once) to the matmul dtype. Call once per parameter set."""
    w1, b1 = params["w1"], params["b1"]
    w2, b2 = params["w2"], params["b2"]
    w3, b3 = params["w3"], params["b3"]
    n_actions = w3.shape[1]

    # sigmoid(z) = 0.5*tanh(0.5*z) + 0.5 ; fold the 0.5 scale into this layer's
    # weights and the +0.5 offset into the *next* layer's bias (exact algebra).
    w1p = 0.5 * w1
    b1p = 0.5 * b1
    w2p = 0.25 * w2
    b2p = 0.5 * b2 + 0.25 * jnp.sum(w2, axis=0, keepdims=True)
    w3p = 0.5 * w3
    b3p = b3 + 0.5 * jnp.sum(w3, axis=0, keepdims=True)

    # Lane-dense output: pad the final layer to a multiple of 128 lanes so the
    # kernel emits full-width stores. Padded lanes are tanh(0)=0 and sliced off.
    n_pad = max(lane_pad, _round_up(n_actions, lane_pad))
    if n_pad != n_actions:
        w3p = jnp.zeros((w3p.shape[0], n_pad), w3p.dtype).at[:, :n_actions].set(w3p)
        b3p = jnp.zeros((1, n_pad), b3p.dtype).at[:, :n_actions].set(b3p)

    return {
        "w1": w1p.astype(matmul_dtype), "b1": b1p.astype(jnp.float32),
        "w2": w2p.astype(matmul_dtype), "b2": b2p.astype(jnp.float32),
        "w3": w3p.astype(matmul_dtype), "b3": b3p.astype(jnp.float32),
        "n_actions": n_actions, "n_pad": n_pad,
    }


# --------------------------------------------------------------------------- #
# Forward wrapper.
# --------------------------------------------------------------------------- #
def actor_forward(state, prepped, *, max_block_b=1024, num_tc=1):
    """state: (B, input_dims) float32; prepped: output of prepare_params().

    Returns (B, n_actions) float32 == tanh(fc3(sigmoid(fc2(sigmoid(fc1(state)))))).
    num_tc: TensorCores to shard across (1 on v5e/v6e, 2 on v7x) -> grid steps.
    """
    w1, b1 = prepped["w1"], prepped["b1"]
    w2, b2 = prepped["w2"], prepped["b2"]
    w3, b3 = prepped["w3"], prepped["b3"]
    n_actions, n_pad = prepped["n_actions"], prepped["n_pad"]

    B, in_dims = state.shape

    # Tile size: as few grid steps as possible (per-step overhead dominates this
    # kernel), but keep num_tc steps so the "parallel" axis can shard across
    # TensorCores on v7x. Sublane-align to 8; no batch padding — the ragged
    # last tile is masked by Pallas on store and discarded rows never land.
    target_steps = max(1, num_tc)
    tb = min(max_block_b, _round_up(pl.cdiv(B, target_steps), 8))
    nb = pl.cdiv(B, tb)

    # Weights/biases: same (0,0) block every grid step -> VMEM-resident.
    resident = lambda a: pl.BlockSpec(a.shape, lambda i: (0,) * a.ndim)

    out = pl.pallas_call(
        actor_kernel,
        out_shape=jax.ShapeDtypeStruct((B, n_pad), jnp.float32),
        grid=(nb,),
        in_specs=[
            pl.BlockSpec((tb, in_dims), lambda i: (i, 0)),   # streamed activations
            resident(w1), resident(b1),
            resident(w2), resident(b2),
            resident(w3), resident(b3),
        ],
        out_specs=pl.BlockSpec((tb, n_pad), lambda i: (i, 0)),
        compiler_params=pltpu.CompilerParams(
            dimension_semantics=("parallel",),  # megacore sharding on v7x
        ),
    )(state, w1, b1, w2, b2, w3, b3)

    # Consumers that can use the padded (B, n_pad) slab directly may skip this
    # slice; it is kept here to match the module's (B, n_actions) contract.
    return out[:, :n_actions]


def init_params(key, input_dims, fc1_dims, fc2_dims, n_actions):
    """Deterministic init mimicking torch Linear's U(-1/sqrt(fan_in), 1/sqrt(fan_in))."""
    ks = jax.random.split(key, 6)

    def lin(kw, kb, fan_in, fan_out):
        bound = 1.0 / jnp.sqrt(fan_in)
        w = jax.random.uniform(kw, (fan_in, fan_out), jnp.float32, -bound, bound)
        b = jax.random.uniform(kb, (1, fan_out), jnp.float32, -bound, bound)
        return w, b

    w1, b1 = lin(ks[0], ks[1], input_dims, fc1_dims)
    w2, b2 = lin(ks[2], ks[3], fc1_dims, fc2_dims)
    w3, b3 = lin(ks[4], ks[5], fc2_dims, n_actions)
    return {"w1": w1, "b1": b1, "w2": w2, "b2": b2, "w3": w3, "b3": b3}


if __name__ == "__main__":
    batch = 256
    input_dims, fc1_dims, fc2_dims, n_actions = 32, 64, 32, 8

    key = jax.random.PRNGKey(0)
    kx, kp = jax.random.split(key)
    state = jax.random.normal(kx, (batch, input_dims), jnp.float32)
    params = init_params(kp, input_dims, fc1_dims, fc2_dims, n_actions)

    # One-time prep (fold sigmoid constants, lane-pad fc3, cast weights).
    # f32 matmuls here keep the correctness check tight; pass
    # matmul_dtype=jnp.bfloat16 for inference (bf16 MXU is native on v5e/v6e/v7x,
    # but expect ~1e-2 level differences vs. the f32 reference).
    prepped = prepare_params(params, matmul_dtype=jnp.float32)

    # Pure-JAX reference of the same forward pass (un-folded parameters).
    def ref(x, p):
        h1 = jax.nn.sigmoid(x @ p["w1"] + p["b1"])
        h2 = jax.nn.sigmoid(h1 @ p["w2"] + p["b2"])
        return jnp.tanh(h2 @ p["w3"] + p["b3"])

    expected = ref(state, params)

    # Single-TensorCore path (v5e/v6e): grid collapses to 1 step of 256 rows.
    mu = actor_forward(state, prepped, num_tc=1)
    jax.block_until_ready(mu)
    assert mu.shape == (batch, n_actions)
    assert jnp.allclose(mu, expected, atol=1e-4, rtol=1e-4)

    # Megacore-style path (v7x): 2 grid steps of 128 rows, "parallel" axis.
    mu2 = actor_forward(state, prepped, num_tc=2)
    jax.block_until_ready(mu2)
    assert jnp.allclose(mu2, expected, atol=1e-4, rtol=1e-4)

    # Ragged tiny batch (B=4 < sublane tile of 8): masked edge block, no jnp.pad.
    mu_small = actor_forward(state[:4], prepped)
    jax.block_until_ready(mu_small)
    assert mu_small.shape == (4, n_actions)
    assert jnp.allclose(mu_small, expected[:4], atol=1e-4, rtol=1e-4)

    # TODO(synk): Adam optimiser step and checkpoint save/load are training/IO
    # concerns, not part of the forward pass, and are not implemented here.

    print("KERNEL_OK")
</pallas_src>

<mosaic_0001>
module attributes {stable_mosaic.version = 11 : i64} {
  func.func @actor_kernel(%arg0: i32, %arg1: memref<256x32xf32, #tpu.memory_space<vmem>>, %arg2: memref<32x64xf32, #tpu.memory_space<vmem>>, %arg3: memref<1x64xf32, #tpu.memory_space<vmem>>, %arg4: memref<64x32xf32, #tpu.memory_space<vmem>>, %arg5: memref<1x32xf32, #tpu.memory_space<vmem>>, %arg6: memref<32x128xf32, #tpu.memory_space<vmem>>, %arg7: memref<1x128xf32, #tpu.memory_space<vmem>>, %arg8: memref<256x128xf32, #tpu.memory_space<vmem>>) attributes {dimension_semantics = [#tpu.dimension_semantics<parallel>], iteration_bounds = array<i64: 1>, scalar_prefetch = 0 : i64, scratch_operands = 0 : i64, tpu.core_type = #tpu.core_type<tc>, window_params = [{transform_indices = @transform_0, window_bounds = array<i64: 256, 32>}, {pipeline_mode = #tpu.pipeline_mode<synchronous>, transform_indices = @transform_1, window_bounds = array<i64: 32, 64>}, {pipeline_mode = #tpu.pipeline_mode<synchronous>, transform_indices = @transform_2, window_bounds = array<i64: 1, 64>}, {pipeline_mode = #tpu.pipeline_mode<synchronous>, transform_indices = @transform_3, window_bounds = array<i64: 64, 32>}, {pipeline_mode = #tpu.pipeline_mode<synchronous>, transform_indices = @transform_4, window_bounds = array<i64: 1, 32>}, {pipeline_mode = #tpu.pipeline_mode<synchronous>, transform_indices = @transform_5, window_bounds = array<i64: 32, 128>}, {pipeline_mode = #tpu.pipeline_mode<synchronous>, transform_indices = @transform_6, window_bounds = array<i64: 1, 128>}, {transform_indices = @transform_7, window_bounds = array<i64: 256, 128>}]} {
    %c0 = arith.constant 0 : index
    %c0_0 = arith.constant 0 : index
    %0 = vector.load %arg1[%c0, %c0_0] : memref<256x32xf32, #tpu.memory_space<vmem>>, vector<256x32xf32>
    %c0_1 = arith.constant 0 : index
    %c0_2 = arith.constant 0 : index
    %1 = vector.load %arg2[%c0_1, %c0_2] : memref<32x64xf32, #tpu.memory_space<vmem>>, vector<32x64xf32>
    %cst = arith.constant dense<0.000000e+00> : vector<256x64xf32>
    %2 = tpu.matmul %0, %1, %cst {dimension_numbers = #tpu.dot_dimension_numbers<[1], [0], [0], [1], [0, 0, 1, 1], [], []>} : vector<256x32xf32>, vector<32x64xf32>, vector<256x64xf32> -> vector<256x64xf32>
    %c0_3 = arith.constant 0 : index
    %c0_4 = arith.constant 0 : index
    %3 = vector.load %arg3[%c0_3, %c0_4] : memref<1x64xf32, #tpu.memory_space<vmem>>, vector<1x64xf32>
    %4 = vector.broadcast %3 : vector<1x64xf32> to vector<256x64xf32>
    %5 = arith.addf %2, %4 : vector<256x64xf32>
    %6 = math.tanh %5 : vector<256x64xf32>
    %c0_5 = arith.constant 0 : index
    %c0_6 = arith.constant 0 : index
    %7 = vector.load %arg4[%c0_5, %c0_6] : memref<64x32xf32, #tpu.memory_space<vmem>>, vector<64x32xf32>
    %cst_7 = arith.constant dense<0.000000e+00> : vector<256x32xf32>
    %8 = tpu.matmul %6, %7, %cst_7 {dimension_numbers = #tpu.dot_dimension_numbers<[1], [0], [0], [1], [0, 0, 1, 1], [], []>} : vector<256x64xf32>, vector<64x32xf32>, vector<256x32xf32> -> vector<256x32xf32>
    %c0_8 = arith.constant 0 : index
    %c0_9 = arith.constant 0 : index
    %9 = vector.load %arg5[%c0_8, %c0_9] : memref<1x32xf32, #tpu.memory_space<vmem>>, vector<1x32xf32>
    %10 = vector.broadcast %9 : vector<1x32xf32> to vector<256x32xf32>
    %11 = arith.addf %8, %10 : vector<256x32xf32>
    %12 = math.tanh %11 : vector<256x32xf32>
    %c0_10 = arith.constant 0 : index
    %c0_11 = arith.constant 0 : index
    %13 = vector.load %arg6[%c0_10, %c0_11] : memref<32x128xf32, #tpu.memory_space<vmem>>, vector<32x128xf32>
    %cst_12 = arith.constant dense<0.000000e+00> : vector<256x128xf32>
    %14 = tpu.matmul %12, %13, %cst_12 {dimension_numbers = #tpu.dot_dimension_numbers<[1], [0], [0], [1], [0, 0, 1, 1], [], []>} : vector<256x32xf32>, vector<32x128xf32>, vector<256x128xf32> -> vector<256x128xf32>
    %c0_13 = arith.constant 0 : index
    %c0_14 = arith.constant 0 : index
    %15 = vector.load %arg7[%c0_13, %c0_14] : memref<1x128xf32, #tpu.memory_space<vmem>>, vector<1x128xf32>
    %16 = vector.broadcast %15 : vector<1x128xf32> to vector<256x128xf32>
    %17 = arith.addf %14, %16 : vector<256x128xf32>
    %18 = math.tanh %17 : vector<256x128xf32>
    %c0_15 = arith.constant 0 : index
    %c0_16 = arith.constant 0 : index
    %19 = vector.load %arg8[%c0_15, %c0_16] : memref<256x128xf32, #tpu.memory_space<vmem>>, vector<256x128xf32>
    tpu.vector_store %arg8[%c0_15, %c0_16], %18 {strides = array<i32>} : memref<256x128xf32, #tpu.memory_space<vmem>>, vector<256x128xf32>,
    return
  }
  func.func @transform_0(%arg0: i32) -> (i32, i32) {
    %c0_i32 = arith.constant 0 : i32
    %c0_i32_0 = arith.constant 0 : i32
    return %arg0, %c0_i32 : i32, i32
  }
  func.func @transform_1(%arg0: i32) -> (i32, i32) {
    %c0_i32 = arith.constant 0 : i32
    %c0_i32_0 = arith.constant 0 : i32
    %c0_i32_1 = arith.constant 0 : i32
    return %c0_i32, %c0_i32_0 : i32, i32
  }
  func.func @transform_2(%arg0: i32) -> (i32, i32) {
    %c0_i32 = arith.constant 0 : i32
    %c0_i32_0 = arith.constant 0 : i32
    %c0_i32_1 = arith.constant 0 : i32
    return %c0_i32, %c0_i32_0 : i32, i32
  }
  func.func @transform_3(%arg0: i32) -> (i32, i32) {
    %c0_i32 = arith.constant 0 : i32
    %c0_i32_0 = arith.constant 0 : i32
    %c0_i32_1 = arith.constant 0 : i32
    return %c0_i32, %c0_i32_0 : i32, i32
  }
  func.func @transform_4(%arg0: i32) -> (i32, i32) {
    %c0_i32 = arith.constant 0 : i32
    %c0_i32_0 = arith.constant 0 : i32
    %c0_i32_1 = arith.constant 0 : i32
    return %c0_i32, %c0_i32_0 : i32, i32
  }
  func.func @transform_5(%arg0: i32) -> (i32, i32) {
    %c0_i32 = arith.constant 0 : i32
    %c0_i32_0 = arith.constant 0 : i32
    %c0_i32_1 = arith.constant 0 : i32
    return %c0_i32, %c0_i32_0 : i32, i32
  }
  func.func @transform_6(%arg0: i32) -> (i32, i32) {
    %c0_i32 = arith.constant 0 : i32
    %c0_i32_0 = arith.constant 0 : i32
    %c0_i32_1 = arith.constant 0 : i32
    return %c0_i32, %c0_i32_0 : i32, i32
  }
  func.func @transform_7(%arg0: i32) -> (i32, i32) {
    %c0_i32 = arith.constant 0 : i32
    %c0_i32_0 = arith.constant 0 : i32
    return %arg0, %c0_i32 : i32, i32
  }
}

</mosaic_0001>

<llo_original>
// kernel: tpu_custom_call.1
$region0: #{tpu_custom_call.1}
  #allocation0 [shape = 'u32[]', space=smem, size = 0x4, offset = 0x4, fixed_abs, tag = 'smem constant byte address 0x4 - core index']
  #allocation1 [shape = 'u32[144,128]{1,0:T(1,128)}', space=vmem, size = 0x12000, scoped, tag = 'internal scratch']
  %s0 = inlined_call_operand.vmem [shape: f32[256,32], index: 0, kind: input, shape index: {}]
  %s1 = inlined_call_operand.vmem [shape: f32[32,64], index: 1, kind: input, shape index: {}]
  %s2 = inlined_call_operand.vmem [shape: f32[1,64], index: 2, kind: input, shape index: {}]
  %s3 = inlined_call_operand.vmem [shape: f32[64,32], index: 3, kind: input, shape index: {}]
  %s4 = inlined_call_operand.vmem [shape: f32[1,32], index: 4, kind: input, shape index: {}]
  %s5 = inlined_call_operand.vmem [shape: f32[32,128], index: 5, kind: input, shape index: {}]
  %s6 = inlined_call_operand.vmem [shape: f32[1,128], index: 6, kind: input, shape index: {}]
  %s7 = inlined_call_operand.hbm [shape: f32[256,128], index: 7, kind: output, shape index: {}]
  %s8 = sld [smem:[#allocation0]]
  $region38: #{tpu_custom_call.1} parent=0
    _
  %s10 = ssub.s32 1, %s8
  %s11 = scalar_select 0, %s10, %s8
  $region1: #{tpu_custom_call.1} parent=0
    #allocation2 [shape = 'u8[131072]{0}', space=vmem, size = 0x20000, scoped, tag = 'output window, operand 0, single buffered']
    #allocation3 [shape = 's32[1]{0}', space=sflag, size = 0x4, scoped, tag = 'scoped memory for tpu_custom_call.1']
    %12 = vsyncpa [#allocation3], 0
    // Predicated region
    $region2: #{tpu_custom_call.1} parent=1 // pred_check
      _
    $region3: #{tpu_custom_call.1} parent=1 // pred_check_branch
      %14 = sbr.rel (0) target = $region5
    $region4: #{tpu_custom_call.1} parent=1 // pred_region
      _
    $region5: #{tpu_custom_call.1} parent=1 // pred_fallthru
      _
    // Predicated region
    $region6: #{tpu_custom_call.1} parent=1 // pred_check
      _
    $region7: #{tpu_custom_call.1} parent=1 // pred_check_branch
      %16 = sbr.rel (0) target = $region9
    $region8: #{tpu_custom_call.1} parent=1 // pred_region
      _
    $region9: #{tpu_custom_call.1} parent=1 // pred_fallthru
      _
    // Predicated region
    $region10: #{tpu_custom_call.1} parent=1 // pred_check
      _
    $region11: #{tpu_custom_call.1} parent=1 // pred_check_branch
      %18 = sbr.rel (0) target = $region13
    $region12: #{tpu_custom_call.1} parent=1 // pred_region
      _
    $region13: #{tpu_custom_call.1} parent=1 // pred_fallthru
      _
    // Predicated region
    $region14: #{tpu_custom_call.1} parent=1 // pred_check
      _
    $region15: #{tpu_custom_call.1} parent=1 // pred_check_branch
      %20 = sbr.rel (0) target = $region17
    $region16: #{tpu_custom_call.1} parent=1 // pred_region
      _
    $region17: #{tpu_custom_call.1} parent=1 // pred_fallthru
      _
    // Predicated region
    $region18: #{tpu_custom_call.1} parent=1 // pred_check
      _
    $region19: #{tpu_custom_call.1} parent=1 // pred_check_branch
      %22 = sbr.rel (0) target = $region21
    $region20: #{tpu_custom_call.1} parent=1 // pred_region
      _
    $region21: #{tpu_custom_call.1} parent=1 // pred_fallthru
      _
    // Predicated region
    $region22: #{tpu_custom_call.1} parent=1 // pred_check
      _
    $region23: #{tpu_custom_call.1} parent=1 // pred_check_branch
      %24 = sbr.rel (0) target = $region25
    $region24: #{tpu_custom_call.1} parent=1 // pred_region
      _
    $region25: #{tpu_custom_call.1} parent=1 // pred_fallthru
      _
    // Predicated region
    $region26: #{tpu_custom_call.1} parent=1 // pred_check
      _
    $region27: #{tpu_custom_call.1} parent=1 // pred_check_branch
      %26 = sbr.rel (0) target = $region29
    $region28: #{tpu_custom_call.1} parent=1 // pred_region
      _
    $region29: #{tpu_custom_call.1} parent=1 // pred_fallthru
      _
    %v27 = vld [vmem:[%s0] sm:$0xff]
    %v28 = vld [vmem:[%s0 + $0x8] sm:$0xff]
    %v29 = vld [vmem:[%s0 + $0x10] sm:$0xff]
    %v30 = vld [vmem:[%s0 + $0x18] sm:$0xff]
    %v31 = vld [vmem:[%s0 + $0x20] sm:$0xff]
    %v32 = vld [vmem:[%s0 + $0x28] sm:$0xff]
    %v33 = vld [vmem:[%s0 + $0x30] sm:$0xff]
    %v34 = vld [vmem:[%s0 + $0x38] sm:$0xff]
    %v35 = vld [vmem:[%s0 + $0x40] sm:$0xff]
    %v36 = vld [vmem:[%s0 + $0x48] sm:$0xff]
    %v37 = vld [vmem:[%s0 + $0x50] sm:$0xff]
    %v38 = vld [vmem:[%s0 + $0x58] sm:$0xff]
    %v39 = vld [vmem:[%s0 + $0x60] sm:$0xff]
    %v40 = vld [vmem:[%s0 + $0x68] sm:$0xff]
    %v41 = vld [vmem:[%s0 + $0x70] sm:$0xff]
    %v42 = vld [vmem:[%s0 + $0x78] sm:$0xff]
    %v43 = vld [vmem:[%s0 + $0x80] sm:$0xff]
    %v44 = vld [vmem:[%s0 + $0x88] sm:$0xff]
    %v45 = vld [vmem:[%s0 + $0x90] sm:$0xff]
    %v46 = vld [vmem:[%s0 + $0x98] sm:$0xff]
    %v47 = vld [vmem:[%s0 + $0xa0] sm:$0xff]
    %v48 = vld [vmem:[%s0 + $0xa8] sm:$0xff]
    %v49 = vld [vmem:[%s0 + $0xb0] sm:$0xff]
    %v50 = vld [vmem:[%s0 + $0xb8] sm:$0xff]
    %v51 = vld [vmem:[%s0 + $0xc0] sm:$0xff]
    %v52 = vld [vmem:[%s0 + $0xc8] sm:$0xff]
    %v53 = vld [vmem:[%s0 + $0xd0] sm:$0xff]
    %v54 = vld [vmem:[%s0 + $0xd8] sm:$0xff]
    %v55 = vld [vmem:[%s0 + $0xe0] sm:$0xff]
    %v56 = vld [vmem:[%s0 + $0xe8] sm:$0xff]
    %v57 = vld [vmem:[%s0 + $0xf0] sm:$0xff]
    %v58 = vld [vmem:[%s0 + $0xf8] sm:$0xff]
    %v59 = vld [vmem:[%s1] sm:$0xff]
    %v60 = vld [vmem:[%s1 + $0x8] sm:$0xff]
    %v61 = vld [vmem:[%s1 + $0x10] sm:$0xff]
    %v62 = vld [vmem:[%s1 + $0x18] sm:$0xff]
    %v63 = vld [vmem:[%s2] sm:$0x1]
    %v65 = vlaneseq
    %v66 = vshrl.u32 %v65, 7
    %v67 = vsub.s32 0, %v66
    %v68 = vrot.slane %v63, %v67
    %vm70 = vcmask 261120
    %v72 = vsel %vm70, %v27, 0
    %v75 = vsel %vm70, %v28, 0
    %v78 = vsel %vm70, %v29, 0
    %v81 = vsel %vm70, %v30, 0
    %v84 = vsel %vm70, %v31, 0
    %v87 = vsel %vm70, %v32, 0
    %v90 = vsel %vm70, %v33, 0
    %v93 = vsel %vm70, %v34, 0
    %v96 = vsel %vm70, %v35, 0
    %v99 = vsel %vm70, %v36, 0
    %v102 = vsel %vm70, %v37, 0
    %v105 = vsel %vm70, %v38, 0
    %v108 = vsel %vm70, %v39, 0
    %v111 = vsel %vm70, %v40, 0
    %v114 = vsel %vm70, %v41, 0
    %v117 = vsel %vm70, %v42, 0
    %v120 = vsel %vm70, %v43, 0
    %v123 = vsel %vm70, %v44, 0
    %v126 = vsel %vm70, %v45, 0
    %v129 = vsel %vm70, %v46, 0
    %v132 = vsel %vm70, %v47, 0
    %v135 = vsel %vm70, %v48, 0
    %v138 = vsel %vm70, %v49, 0
    %v141 = vsel %vm70, %v50, 0
    %v144 = vsel %vm70, %v51, 0
    %v147 = vsel %vm70, %v52, 0
    %v150 = vsel %vm70, %v53, 0
    %v153 = vsel %vm70, %v54, 0
    %v156 = vsel %vm70, %v55, 0
    %v159 = vsel %vm70, %v56, 0
    %v162 = vsel %vm70, %v57, 0
    %v165 = vsel %vm70, %v58, 0
    %167 = vmatprep.subr.mxu0 0.0
    %168 = vmatpush1.msra.mxu0 %v59
    %169 = vmatprep.subr.mxu0 0.0
    %170 = vmatpush1.msra.mxu0 %v60
    %171 = vmatprep.subr.mxu0 0.0
    %172 = vmatpush1.msra.mxu0 %v61
    %173 = vmatprep.subr.mxu0 0.0
    %174 = vmatpush1.msra.mxu0 %v62
    %175 = vmatprep.subr.mxu0 0.0
    %176 = vmatpush1.msra.mxu0 0.0
    %177 = vmatprep.subr.mxu0 0.0
    %178 = vmatpush1.msra.mxu0 0.0
    %179 = vmatprep.subr.mxu0 0.0
    %180 = vmatpush1.msra.mxu0 0.0
    %181 = vmatprep.subr.mxu0 0.0
    %182 = vmatpush1.msra.mxu0 0.0
    %183 = vmatprep.subr.mxu0 0.0
    %184 = vmatpush1.msra.mxu0 0.0
    %185 = vmatprep.subr.mxu0 0.0
    %186 = vmatpush1.msra.mxu0 0.0
    %187 = vmatprep.subr.mxu0 0.0
    %188 = vmatpush1.msra.mxu0 0.0
    %189 = vmatprep.subr.mxu0 0.0
    %190 = vmatpush1.msra.mxu0 0.0
    %191 = vmatprep.subr.mxu0 0.0
    %192 = vmatpush1.msra.mxu0 0.0
    %193 = vmatprep.subr.mxu0 0.0
    %194 = vmatpush1.msra.mxu0 0.0
    %195 = vmatprep.subr.mxu0 0.0
    %196 = vmatpush1.msra.mxu0 0.0
    %197 = vmatprep.subr.mxu0 0.0
    %198 = vmatpush1.msra.mxu0 0.0
    %199 = vmatprep.subr.mxu0 0.0
    %200 = vmatpush1.msra.mxu0 0.0
    %201 = vmatprep.subr.mxu0 0.0
    %202 = vmatpush1.msra.mxu0 0.0
    %203 = vmatprep.subr.mxu0 0.0
    %204 = vmatpush1.msra.mxu0 0.0
    %205 = vmatprep.subr.mxu0 0.0
    %206 = vmatpush1.msra.mxu0 0.0
    %207 = vmatprep.subr.mxu0 0.0
    %208 = vmatpush1.msra.mxu0 0.0
    %209 = vmatprep.subr.mxu0 0.0
    %210 = vmatpush1.msra.mxu0 0.0
    %211 = vmatprep.subr.mxu0 0.0
    %212 = vmatpush1.msra.mxu0 0.0
    %213 = vmatprep.subr.mxu0 0.0
    %214 = vmatpush1.msra.mxu0 0.0
    %215 = vmatprep.subr.mxu0 0.0
    %216 = vmatpush1.msra.mxu0 0.0
    %217 = vmatprep.subr.mxu0 0.0
    %218 = vmatpush1.msra.mxu0 0.0
    %219 = vmatprep.subr.mxu0 0.0
    %220 = vmatpush1.msra.mxu0 0.0
    %221 = vmatprep.subr.mxu0 0.0
    %222 = vmatpush1.msra.mxu0 0.0
    %223 = vmatprep.subr.mxu0 0.0
    %224 = vmatpush1.msra.mxu0 0.0
    %225 = vmatprep.subr.mxu0 0.0
    %226 = vmatpush1.msra.mxu0 0.0
    %227 = vmatprep.subr.mxu0 0.0
    %228 = vmatpush1.msra.mxu0 0.0
    %229 = vmatprep.subr.mxu0 0.0
    %230 = vmatpush1.msra.mxu0 0.0
    %231 = vmatprep.mubr.f32.mxu0 0.0
    %232 = vmatmul.mubr.f32.gmra.mrb[0].mxu0 %v72
    %v233 = vpop.f32.mrb[0].mxu0
    %v234 = vadd.f32 %v68, %v233
    %v235 = vpop.f32.mrb[0].mxu0
    %236 = vmatprep.mubr.f32.mxu0 0.0
    %237 = vmatmul.mubr.f32.gmra.mrb[0].mxu0 %v75
    %v238 = vpop.f32.mrb[0].mxu0
    %v239 = vadd.f32 %v68, %v238
    %v240 = vpop.f32.mrb[0].mxu0
    %241 = vmatprep.mubr.f32.mxu0 0.0
    %242 = vmatmul.mubr.f32.gmra.mrb[0].mxu0 %v78
    %v243 = vpop.f32.mrb[0].mxu0
    %v244 = vadd.f32 %v68, %v243
    %v245 = vpop.f32.mrb[0].mxu0
    %246 = vmatprep.mubr.f32.mxu0 0.0
    %247 = vmatmul.mubr.f32.gmra.mrb[0].mxu0 %v81
    %v248 = vpop.f32.mrb[0].mxu0
    %v249 = vadd.f32 %v68, %v248
    %v250 = vpop.f32.mrb[0].mxu0
    %251 = vmatprep.mubr.f32.mxu0 0.0
    %252 = vmatmul.mubr.f32.gmra.mrb[0].mxu0 %v84
    %v253 = vpop.f32.mrb[0].mxu0
    %v254 = vadd.f32 %v68, %v253
    %v255 = vpop.f32.mrb[0].mxu0
    %256 = vmatprep.mubr.f32.mxu0 0.0
    %257 = vmatmul.mubr.f32.gmra.mrb[0].mxu0 %v87
    %v258 = vpop.f32.mrb[0].mxu0
    %v259 = vadd.f32 %v68, %v258
    %v260 = vpop.f32.mrb[0].mxu0
    %261 = vmatprep.mubr.f32.mxu0 0.0
    %262 = vmatmul.mubr.f32.gmra.mrb[0].mxu0 %v90
    %v263 = vpop.f32.mrb[0].mxu0
    %v264 = vadd.f32 %v68, %v263
    %v265 = vpop.f32.mrb[0].mxu0
    %266 = vmatprep.mubr.f32.mxu0 0.0
    %267 = vmatmul.mubr.f32.gmra.mrb[0].mxu0 %v93
    %v268 = vpop.f32.mrb[0].mxu0
    %v269 = vadd.f32 %v68, %v268
    %v270 = vpop.f32.mrb[0].mxu0
    %271 = vmatprep.mubr.f32.mxu0 0.0
    %272 = vmatmul.mubr.f32.gmra.mrb[0].mxu0 %v96
    %v273 = vpop.f32.mrb[0].mxu0
    %v274 = vadd.f32 %v68, %v273
    %v275 = vpop.f32.mrb[0].mxu0
    %276 = vmatprep.mubr.f32.mxu0 0.0
    %277 = vmatmul.mubr.f32.gmra.mrb[0].mxu0 %v99
    %v278 = vpop.f32.mrb[0].mxu0
    %v279 = vadd.f32 %v68, %v278
    %v280 = vpop.f32.mrb[0].mxu0
    %281 = vmatprep.mubr.f32.mxu0 0.0
    %282 = vmatmul.mubr.f32.gmra.mrb[0].mxu0 %v102
    %v283 = vpop.f32.mrb[0].mxu0
    %v284 = vadd.f32 %v68, %v283
    %v285 = vpop.f32.mrb[0].mxu0
    %286 = vmatprep.mubr.f32.mxu0 0.0
    %287 = vmatmul.mubr.f32.gmra.mrb[0].mxu0 %v105
    %v288 = vpop.f32.mrb[0].mxu0
    %v289 = vadd.f32 %v68, %v288
    %v290 = vpop.f32.mrb[0].mxu0
    %291 = vmatprep.mubr.f32.mxu0 0.0
    %292 = vmatmul.mubr.f32.gmra.mrb[0].mxu0 %v108
    %v293 = vpop.f32.mrb[0].mxu0
    %v294 = vadd.f32 %v68, %v293
    %v295 = vpop.f32.mrb[0].mxu0
    %296 = vmatprep.mubr.f32.mxu0 0.0
    %297 = vmatmul.mubr.f32.gmra.mrb[0].mxu0 %v111
    %v298 = vpop.f32.mrb[0].mxu0
    %v299 = vadd.f32 %v68, %v298
    %v300 = vpop.f32.mrb[0].mxu0
    %301 = vmatprep.mubr.f32.mxu0 0.0
    %302 = vmatmul.mubr.f32.gmra.mrb[0].mxu0 %v114
    %v303 = vpop.f32.mrb[0].mxu0
    %v304 = vadd.f32 %v68, %v303
    %v305 = vpop.f32.mrb[0].mxu0
    %306 = vmatprep.mubr.f32.mxu0 0.0
    %307 = vmatmul.mubr.f32.gmra.mrb[0].mxu0 %v117
    %v308 = vpop.f32.mrb[0].mxu0
    %v309 = vadd.f32 %v68, %v308
    %v310 = vpop.f32.mrb[0].mxu0
    %311 = vmatprep.mubr.f32.mxu0 0.0
    %312 = vmatmul.mubr.f32.gmra.mrb[0].mxu0 %v120
    %v313 = vpop.f32.mrb[0].mxu0
    %v314 = vadd.f32 %v68, %v313
    %v315 = vpop.f32.mrb[0].mxu0
    %316 = vmatprep.mubr.f32.mxu0 0.0
    %317 = vmatmul.mubr.f32.gmra.mrb[0].mxu0 %v123
    %v318 = vpop.f32.mrb[0].mxu0
    %v319 = vadd.f32 %v68, %v318
    %v320 = vpop.f32.mrb[0].mxu0
    %321 = vmatprep.mubr.f32.mxu0 0.0
    %322 = vmatmul.mubr.f32.gmra.mrb[0].mxu0 %v126
    %v323 = vpop.f32.mrb[0].mxu0
    %v324 = vadd.f32 %v68, %v323
    %v325 = vpop.f32.mrb[0].mxu0
    %326 = vmatprep.mubr.f32.mxu0 0.0
    %327 = vmatmul.mubr.f32.gmra.mrb[0].mxu0 %v129
    %v328 = vpop.f32.mrb[0].mxu0
    %v329 = vadd.f32 %v68, %v328
    %v330 = vpop.f32.mrb[0].mxu0
    %331 = vmatprep.mubr.f32.mxu0 0.0
    %332 = vmatmul.mubr.f32.gmra.mrb[0].mxu0 %v132
    %v333 = vpop.f32.mrb[0].mxu0
    %v334 = vadd.f32 %v68, %v333
    %v335 = vpop.f32.mrb[0].mxu0
    %336 = vmatprep.mubr.f32.mxu0 0.0
    %337 = vmatmul.mubr.f32.gmra.mrb[0].mxu0 %v135
    %v338 = vpop.f32.mrb[0].mxu0
    %v339 = vadd.f32 %v68, %v338
    %v340 = vpop.f32.mrb[0].mxu0
    %341 = vmatprep.mubr.f32.mxu0 0.0
    %342 = vmatmul.mubr.f32.gmra.mrb[0].mxu0 %v138
    %v343 = vpop.f32.mrb[0].mxu0
    %v344 = vadd.f32 %v68, %v343
    %v345 = vpop.f32.mrb[0].mxu0
    %346 = vmatprep.mubr.f32.mxu0 0.0
    %347 = vmatmul.mubr.f32.gmra.mrb[0].mxu0 %v141
    %v348 = vpop.f32.mrb[0].mxu0
    %v349 = vadd.f32 %v68, %v348
    %v350 = vpop.f32.mrb[0].mxu0
    %351 = vmatprep.mubr.f32.mxu0 0.0
    %352 = vmatmul.mubr.f32.gmra.mrb[0].mxu0 %v144
    %v353 = vpop.f32.mrb[0].mxu0
    %v354 = vadd.f32 %v68, %v353
    %v355 = vpop.f32.mrb[0].mxu0
    %356 = vmatprep.mubr.f32.mxu0 0.0
    %357 = vmatmul.mubr.f32.gmra.mrb[0].mxu0 %v147
    %v358 = vpop.f32.mrb[0].mxu0
    %v359 = vadd.f32 %v68, %v358
    %v360 = vpop.f32.mrb[0].mxu0
    %361 = vmatprep.mubr.f32.mxu0 0.0
    %362 = vmatmul.mubr.f32.gmra.mrb[0].mxu0 %v150
    %v363 = vpop.f32.mrb[0].mxu0
    %v364 = vadd.f32 %v68, %v363
    %v365 = vpop.f32.mrb[0].mxu0
    %366 = vmatprep.mubr.f32.mxu0 0.0
    %367 = vmatmul.mubr.f32.gmra.mrb[0].mxu0 %v153
    %v368 = vpop.f32.mrb[0].mxu0
    %v369 = vadd.f32 %v68, %v368
    %v370 = vpop.f32.mrb[0].mxu0
    %371 = vmatprep.mubr.f32.mxu0 0.0
    %372 = vmatmul.mubr.f32.gmra.mrb[0].mxu0 %v156
    %v373 = vpop.f32.mrb[0].mxu0
    %v374 = vadd.f32 %v68, %v373
    %v375 = vpop.f32.mrb[0].mxu0
    %376 = vmatprep.mubr.f32.mxu0 0.0
    %377 = vmatmul.mubr.f32.gmra.mrb[0].mxu0 %v159
    %v378 = vpop.f32.mrb[0].mxu0
    %v379 = vadd.f32 %v68, %v378
    %v380 = vpop.f32.mrb[0].mxu0
    %381 = vmatprep.mubr.f32.mxu0 0.0
    %382 = vmatmul.mubr.f32.gmra.mrb[0].mxu0 %v162
    %v383 = vpop.f32.mrb[0].mxu0
    %v384 = vadd.f32 %v68, %v383
    %v385 = vpop.f32.mrb[0].mxu0
    %386 = vmatprep.mubr.f32.mxu0 0.0
    %387 = vmatmul.mubr.f32.gmra.mrb[0].mxu0 %v165
    %v388 = vpop.f32.mrb[0].mxu0
    %v389 = vadd.f32 %v68, %v388
    %v390 = vpop.f32.mrb[0].mxu0
    %391 = vdwg.mxu0
    %v392 = vtanh.pop %v234
    %v393 = vtanh.pop %v239
    %v394 = vtanh.pop %v244
    %v395 = vtanh.pop %v249
    %v396 = vtanh.pop %v254
    %v397 = vtanh.pop %v259
    %v398 = vtanh.pop %v264
    %v399 = vtanh.pop %v269
    %v400 = vtanh.pop %v274
    %v401 = vtanh.pop %v279
    %v402 = vtanh.pop %v284
    %v403 = vtanh.pop %v289
    %v404 = vtanh.pop %v294
    %v405 = vtanh.pop %v299
    %v406 = vtanh.pop %v304
    %v407 = vtanh.pop %v309
    %v408 = vtanh.pop %v314
    %v409 = vtanh.pop %v319
    %v410 = vtanh.pop %v324
    %v411 = vtanh.pop %v329
    %v412 = vtanh.pop %v334
    %v413 = vtanh.pop %v339
    %v414 = vtanh.pop %v344
    %v415 = vtanh.pop %v349
    %v416 = vtanh.pop %v354
    %v417 = vtanh.pop %v359
    %v418 = vtanh.pop %v364
    %v419 = vtanh.pop %v369
    %v420 = vtanh.pop %v374
    %v421 = vtanh.pop %v379
    %v422 = vtanh.pop %v384
    %v423 = vtanh.pop %v389
    %v424 = vld [vmem:[%s3] sm:$0xff]
    %v425 = vld [vmem:[%s3 + $0x8] sm:$0xff]
    %v426 = vld [vmem:[%s3 + $0x10] sm:$0xff]
    %v427 = vld [vmem:[%s3 + $0x18] sm:$0xff]
    %v428 = vld [vmem:[%s3 + $0x20] sm:$0xff]
    %v429 = vld [vmem:[%s3 + $0x28] sm:$0xff]
    %v430 = vld [vmem:[%s3 + $0x30] sm:$0xff]
    %v431 = vld [vmem:[%s3 + $0x38] sm:$0xff]
    %v432 = vld [vmem:[%s4] sm:$0x1]
    %v434 = vlaneseq
    %v435 = vshrl.u32 %v434, 7
    %v436 = vsub.s32 0, %v435
    %v437 = vrot.slane %v432, %v436
    %vm439 = vcmask 523264
    %v441 = vsel %vm439, %v392, 0
    %v444 = vsel %vm439, %v393, 0
    %v447 = vsel %vm439, %v394, 0
    %v450 = vsel %vm439, %v395, 0
    %v453 = vsel %vm439, %v396, 0
    %v456 = vsel %vm439, %v397, 0
    %v459 = vsel %vm439, %v398, 0
    %v462 = vsel %vm439, %v399, 0
    %v465 = vsel %vm439, %v400, 0
    %v468 = vsel %vm439, %v401, 0
    %v471 = vsel %vm439, %v402, 0
    %v474 = vsel %vm439, %v403, 0
    %v477 = vsel %vm439, %v404, 0
    %v480 = vsel %vm439, %v405, 0
    %v483 = vsel %vm439, %v406, 0
    %v486 = vsel %vm439, %v407, 0
    %v489 = vsel %vm439, %v408, 0
    %v492 = vsel %vm439, %v409, 0
    %v495 = vsel %vm439, %v410, 0
    %v498 = vsel %vm439, %v411, 0
    %v501 = vsel %vm439, %v412, 0
    %v504 = vsel %vm439, %v413, 0
    %v507 = vsel %vm439, %v414, 0
    %v510 = vsel %vm439, %v415, 0
    %v513 = vsel %vm439, %v416, 0
    %v516 = vsel %vm439, %v417, 0
    %v519 = vsel %vm439, %v418, 0
    %v522 = vsel %vm439, %v419, 0
    %v525 = vsel %vm439, %v420, 0
    %v528 = vsel %vm439, %v421, 0
    %v531 = vsel %vm439, %v422, 0
    %v534 = vsel %vm439, %v423, 0
    %536 = vmatprep.subr.mxu0 0.0
    %537 = vmatpush1.msra.mxu0 %v424
    %538 = vmatprep.subr.mxu0 0.0
    %539 = vmatpush1.msra.mxu0 %v425
    %540 = vmatprep.subr.mxu0 0.0
    %541 = vmatpush1.msra.mxu0 %v426
    %542 = vmatprep.subr.mxu0 0.0
    %543 = vmatpush1.msra.mxu0 %v427
    %544 = vmatprep.subr.mxu0 0.0
    %545 = vmatpush1.msra.mxu0 %v428
    %546 = vmatprep.subr.mxu0 0.0
    %547 = vmatpush1.msra.mxu0 %v429
    %548 = vmatprep.subr.mxu0 0.0
    %549 = vmatpush1.msra.mxu0 %v430
    %550 = vmatprep.subr.mxu0 0.0
    %551 = vmatpush1.msra.mxu0 %v431
    %552 = vmatprep.subr.mxu0 0.0
    %553 = vmatpush1.msra.mxu0 0.0
    %554 = vmatprep.subr.mxu0 0.0
    %555 = vmatpush1.msra.mxu0 0.0
    %556 = vmatprep.subr.mxu0 0.0
    %557 = vmatpush1.msra.mxu0 0.0
    %558 = vmatprep.subr.mxu0 0.0
    %559 = vmatpush1.msra.mxu0 0.0
    %560 = vmatprep.subr.mxu0 0.0
    %561 = vmatpush1.msra.mxu0 0.0
    %562 = vmatprep.subr.mxu0 0.0
    %563 = vmatpush1.msra.mxu0 0.0
    %564 = vmatprep.subr.mxu0 0.0
    %565 = vmatpush1.msra.mxu0 0.0
    %566 = vmatprep.subr.mxu0 0.0
    %567 = vmatpush1.msra.mxu0 0.0
    %568 = vmatprep.subr.mxu0 0.0
    %569 = vmatpush1.msra.mxu0 0.0
    %570 = vmatprep.subr.mxu0 0.0
    %571 = vmatpush1.msra.mxu0 0.0
    %572 = vmatprep.subr.mxu0 0.0
    %573 = vmatpush1.msra.mxu0 0.0
    %574 = vmatprep.subr.mxu0 0.0
    %575 = vmatpush1.msra.mxu0 0.0
    %576 = vmatprep.subr.mxu0 0.0
    %577 = vmatpush1.msra.mxu0 0.0
    %578 = vmatprep.subr.mxu0 0.0
    %579 = vmatpush1.msra.mxu0 0.0
    %580 = vmatprep.subr.mxu0 0.0
    %581 = vmatpush1.msra.mxu0 0.0
    %582 = vmatprep.subr.mxu0 0.0
    %583 = vmatpush1.msra.mxu0 0.0
    %584 = vmatprep.subr.mxu0 0.0
    %585 = vmatpush1.msra.mxu0 0.0
    %586 = vmatprep.subr.mxu0 0.0
    %587 = vmatpush1.msra.mxu0 0.0
    %588 = vmatprep.subr.mxu0 0.0
    %589 = vmatpush1.msra.mxu0 0.0
    %590 = vmatprep.subr.mxu0 0.0
    %591 = vmatpush1.msra.mxu0 0.0
    %592 = vmatprep.subr.mxu0 0.0
    %593 = vmatpush1.msra.mxu0 0.0
    %594 = vmatprep.subr.mxu0 0.0
    %595 = vmatpush1.msra.mxu0 0.0
    %596 = vmatprep.subr.mxu0 0.0
    %597 = vmatpush1.msra.mxu0 0.0
    %598 = vmatprep.subr.mxu0 0.0
    %599 = vmatpush1.msra.mxu0 0.0
    %600 = vmatprep.mubr.f32.mxu0 0.0
    %601 = vmatmul.mubr.f32.gmra.mrb[0].mxu0 %v441
    %v602 = vpop.f32.mrb[0].mxu0
    %v603 = vadd.f32 %v437, %v602
    %v604 = vpop.f32.mrb[0].mxu0
    %605 = vmatprep.mubr.f32.mxu0 0.0
    %606 = vmatmul.mubr.f32.gmra.mrb[0].mxu0 %v444
    %v607 = vpop.f32.mrb[0].mxu0
    %v608 = vadd.f32 %v437, %v607
    %v609 = vpop.f32.mrb[0].mxu0
    %610 = vmatprep.mubr.f32.mxu0 0.0
    %611 = vmatmul.mubr.f32.gmra.mrb[0].mxu0 %v447
    %v612 = vpop.f32.mrb[0].mxu0
    %v613 = vadd.f32 %v437, %v612
    %v614 = vpop.f32.mrb[0].mxu0
    %615 = vmatprep.mubr.f32.mxu0 0.0
    %616 = vmatmul.mubr.f32.gmra.mrb[0].mxu0 %v450
    %v617 = vpop.f32.mrb[0].mxu0
    %v618 = vadd.f32 %v437, %v617
    %v619 = vpop.f32.mrb[0].mxu0
    %620 = vmatprep.mubr.f32.mxu0 0.0
    %621 = vmatmul.mubr.f32.gmra.mrb[0].mxu0 %v453
    %v622 = vpop.f32.mrb[0].mxu0
    %v623 = vadd.f32 %v437, %v622
    %v624 = vpop.f32.mrb[0].mxu0
    %625 = vmatprep.mubr.f32.mxu0 0.0
    %626 = vmatmul.mubr.f32.gmra.mrb[0].mxu0 %v456
    %v627 = vpop.f32.mrb[0].mxu0
    %v628 = vadd.f32 %v437, %v627
    %v629 = vpop.f32.mrb[0].mxu0
    %630 = vmatprep.mubr.f32.mxu0 0.0
    %631 = vmatmul.mubr.f32.gmra.mrb[0].mxu0 %v459
    %v632 = vpop.f32.mrb[0].mxu0
    %v633 = vadd.f32 %v437, %v632
    %v634 = vpop.f32.mrb[0].mxu0
    %635 = vmatprep.mubr.f32.mxu0 0.0
    %636 = vmatmul.mubr.f32.gmra.mrb[0].mxu0 %v462
    %v637 = vpop.f32.mrb[0].mxu0
    %v638 = vadd.f32 %v437, %v637
    %v639 = vpop.f32.mrb[0].mxu0
    %640 = vmatprep.mubr.f32.mxu0 0.0
    %641 = vmatmul.mubr.f32.gmra.mrb[0].mxu0 %v465
    %v642 = vpop.f32.mrb[0].mxu0
    %v643 = vadd.f32 %v437, %v642
    %v644 = vpop.f32.mrb[0].mxu0
    %645 = vmatprep.mubr.f32.mxu0 0.0
    %646 = vmatmul.mubr.f32.gmra.mrb[0].mxu0 %v468
    %v647 = vpop.f32.mrb[0].mxu0
    %v648 = vadd.f32 %v437, %v647
    %v649 = vpop.f32.mrb[0].mxu0
    %650 = vmatprep.mubr.f32.mxu0 0.0
    %651 = vmatmul.mubr.f32.gmra.mrb[0].mxu0 %v471
    %v652 = vpop.f32.mrb[0].mxu0
    %v653 = vadd.f32 %v437, %v652
    %v654 = vpop.f32.mrb[0].mxu0
    %655 = vmatprep.mubr.f32.mxu0 0.0
    %656 = vmatmul.mubr.f32.gmra.mrb[0].mxu0 %v474
    %v657 = vpop.f32.mrb[0].mxu0
    %v658 = vadd.f32 %v437, %v657
    %v659 = vpop.f32.mrb[0].mxu0
    %660 = vmatprep.mubr.f32.mxu0 0.0
    %661 = vmatmul.mubr.f32.gmra.mrb[0].mxu0 %v477
    %v662 = vpop.f32.mrb[0].mxu0
    %v663 = vadd.f32 %v437, %v662
    %v664 = vpop.f32.mrb[0].mxu0
    %665 = vmatprep.mubr.f32.mxu0 0.0
    %666 = vmatmul.mubr.f32.gmra.mrb[0].mxu0 %v480
    %v667 = vpop.f32.mrb[0].mxu0
    %v668 = vadd.f32 %v437, %v667
    %v669 = vpop.f32.mrb[0].mxu0
    %670 = vmatprep.mubr.f32.mxu0 0.0
    %671 = vmatmul.mubr.f32.gmra.mrb[0].mxu0 %v483
    %v672 = vpop.f32.mrb[0].mxu0
    %v673 = vadd.f32 %v437, %v672
    %v674 = vpop.f32.mrb[0].mxu0
    %675 = vmatprep.mubr.f32.mxu0 0.0
    %676 = vmatmul.mubr.f32.gmra.mrb[0].mxu0 %v486
    %v677 = vpop.f32.mrb[0].mxu0
    %v678 = vadd.f32 %v437, %v677
    %v679 = vpop.f32.mrb[0].mxu0
    %680 = vmatprep.mubr.f32.mxu0 0.0
    %681 = vmatmul.mubr.f32.gmra.mrb[0].mxu0 %v489
    %v682 = vpop.f32.mrb[0].mxu0
    %v683 = vadd.f32 %v437, %v682
    %v684 = vpop.f32.mrb[0].mxu0
    %685 = vmatprep.mubr.f32.mxu0 0.0
    %686 = vmatmul.mubr.f32.gmra.mrb[0].mxu0 %v492
    %v687 = vpop.f32.mrb[0].mxu0
    %v688 = vadd.f32 %v437, %v687
    %v689 = vpop.f32.mrb[0].mxu0
    %690 = vmatprep.mubr.f32.mxu0 0.0
    %691 = vmatmul.mubr.f32.gmra.mrb[0].mxu0 %v495
    %v692 = vpop.f32.mrb[0].mxu0
    %v693 = vadd.f32 %v437, %v692
    %v694 = vpop.f32.mrb[0].mxu0
    %695 = vmatprep.mubr.f32.mxu0 0.0
    %696 = vmatmul.mubr.f32.gmra.mrb[0].mxu0 %v498
    %v697 = vpop.f32.mrb[0].mxu0
    %v698 = vadd.f32 %v437, %v697
    %v699 = vpop.f32.mrb[0].mxu0
    %700 = vmatprep.mubr.f32.mxu0 0.0
    %701 = vmatmul.mubr.f32.gmra.mrb[0].mxu0 %v501
    %v702 = vpop.f32.mrb[0].mxu0
    %v703 = vadd.f32 %v437, %v702
    %v704 = vpop.f32.mrb[0].mxu0
    %705 = vmatprep.mubr.f32.mxu0 0.0
    %706 = vmatmul.mubr.f32.gmra.mrb[0].mxu0 %v504
    %v707 = vpop.f32.mrb[0].mxu0
    %v708 = vadd.f32 %v437, %v707
    %v709 = vpop.f32.mrb[0].mxu0
    %710 = vmatprep.mubr.f32.mxu0 0.0
    %711 = vmatmul.mubr.f32.gmra.mrb[0].mxu0 %v507
    %v712 = vpop.f32.mrb[0].mxu0
    %v713 = vadd.f32 %v437, %v712
    %v714 = vpop.f32.mrb[0].mxu0
    %715 = vmatprep.mubr.f32.mxu0 0.0
    %716 = vmatmul.mubr.f32.gmra.mrb[0].mxu0 %v510
    %v717 = vpop.f32.mrb[0].mxu0
    %v718 = vadd.f32 %v437, %v717
    %v719 = vpop.f32.mrb[0].mxu0
    %720 = vmatprep.mubr.f32.mxu0 0.0
    %721 = vmatmul.mubr.f32.gmra.mrb[0].mxu0 %v513
    %v722 = vpop.f32.mrb[0].mxu0
    %v723 = vadd.f32 %v437, %v722
    %v724 = vpop.f32.mrb[0].mxu0
    %725 = vmatprep.mubr.f32.mxu0 0.0
    %726 = vmatmul.mubr.f32.gmra.mrb[0].mxu0 %v516
    %v727 = vpop.f32.mrb[0].mxu0
    %v728 = vadd.f32 %v437, %v727
    %v729 = vpop.f32.mrb[0].mxu0
    %730 = vmatprep.mubr.f32.mxu0 0.0
    %731 = vmatmul.mubr.f32.gmra.mrb[0].mxu0 %v519
    %v732 = vpop.f32.mrb[0].mxu0
    %v733 = vadd.f32 %v437, %v732
    %v734 = vpop.f32.mrb[0].mxu0
    %735 = vmatprep.mubr.f32.mxu0 0.0
    %736 = vmatmul.mubr.f32.gmra.mrb[0].mxu0 %v522
    %v737 = vpop.f32.mrb[0].mxu0
    %v738 = vadd.f32 %v437, %v737
    %v739 = vpop.f32.mrb[0].mxu0
    %740 = vmatprep.mubr.f32.mxu0 0.0
    %741 = vmatmul.mubr.f32.gmra.mrb[0].mxu0 %v525
    %v742 = vpop.f32.mrb[0].mxu0
    %v743 = vadd.f32 %v437, %v742
    %v744 = vpop.f32.mrb[0].mxu0
    %745 = vmatprep.mubr.f32.mxu0 0.0
    %746 = vmatmul.mubr.f32.gmra.mrb[0].mxu0 %v528
    %v747 = vpop.f32.mrb[0].mxu0
    %v748 = vadd.f32 %v437, %v747
    %v749 = vpop.f32.mrb[0].mxu0
    %750 = vmatprep.mubr.f32.mxu0 0.0
    %751 = vmatmul.mubr.f32.gmra.mrb[0].mxu0 %v531
    %v752 = vpop.f32.mrb[0].mxu0
    %v753 = vadd.f32 %v437, %v752
    %v754 = vpop.f32.mrb[0].mxu0
    %755 = vmatprep.mubr.f32.mxu0 0.0
    %756 = vmatmul.mubr.f32.gmra.mrb[0].mxu0 %v534
    %v757 = vpop.f32.mrb[0].mxu0
    %v758 = vadd.f32 %v437, %v757
    %v759 = vpop.f32.mrb[0].mxu0
    %760 = vdwg.mxu0
    %v761 = vtanh.pop %v603
    %v762 = vtanh.pop %v608
    %v763 = vtanh.pop %v613
    %v764 = vtanh.pop %v618
    %v765 = vtanh.pop %v623
    %v766 = vtanh.pop %v628
    %v767 = vtanh.pop %v633
    %v768 = vtanh.pop %v638
    %v769 = vtanh.pop %v643
    %v770 = vtanh.pop %v648
    %v771 = vtanh.pop %v653
    %v772 = vtanh.pop %v658
    %v773 = vtanh.pop %v663
    %v774 = vtanh.pop %v668
    %v775 = vtanh.pop %v673
    %v776 = vtanh.pop %v678
    %v777 = vtanh.pop %v683
    %v778 = vtanh.pop %v688
    %v779 = vtanh.pop %v693
    %v780 = vtanh.pop %v698
    %v781 = vtanh.pop %v703
    %v782 = vtanh.pop %v708
    %v783 = vtanh.pop %v713
    %v784 = vtanh.pop %v718
    %v785 = vtanh.pop %v723
    %v786 = vtanh.pop %v728
    %v787 = vtanh.pop %v733
    %v788 = vtanh.pop %v738
    %v789 = vtanh.pop %v743
    %v790 = vtanh.pop %v748
    %v791 = vtanh.pop %v753
    %v792 = vtanh.pop %v758
    %v793 = vld [vmem:[%s5] sm:$0xff]
    %v794 = vld [vmem:[%s5 + $0x8] sm:$0xff]
    %v795 = vld [vmem:[%s5 + $0x10] sm:$0xff]
    %v796 = vld [vmem:[%s5 + $0x18] sm:$0xff]
    %v797 = vld [vmem:[%s6] sm:$0x1]
    %v799 = vlaneseq
    %v800 = vshrl.u32 %v799, 7
    %v801 = vsub.s32 0, %v800
    %v802 = vrot.slane %v797, %v801
    %v805 = vsel %vm70, %v761, 0
    %v808 = vsel %vm70, %v762, 0
    %v811 = vsel %vm70, %v763, 0
    %v814 = vsel %vm70, %v764, 0
    %v817 = vsel %vm70, %v765, 0
    %v820 = vsel %vm70, %v766, 0
    %v823 = vsel %vm70, %v767, 0
    %v826 = vsel %vm70, %v768, 0
    %v829 = vsel %vm70, %v769, 0
    %v832 = vsel %vm70, %v770, 0
    %v835 = vsel %vm70, %v771, 0
    %v838 = vsel %vm70, %v772, 0
    %v841 = vsel %vm70, %v773, 0
    %v844 = vsel %vm70, %v774, 0
    %v847 = vsel %vm70, %v775, 0
    %v850 = vsel %vm70, %v776, 0
    %v853 = vsel %vm70, %v777, 0
    %v856 = vsel %vm70, %v778, 0
    %v859 = vsel %vm70, %v779, 0
    %v862 = vsel %vm70, %v780, 0
    %v865 = vsel %vm70, %v781, 0
    %v868 = vsel %vm70, %v782, 0
    %v871 = vsel %vm70, %v783, 0
    %v874 = vsel %vm70, %v784, 0
    %v877 = vsel %vm70, %v785, 0
    %v880 = vsel %vm70, %v786, 0
    %v883 = vsel %vm70, %v787, 0
    %v886 = vsel %vm70, %v788, 0
    %v889 = vsel %vm70, %v789, 0
    %v892 = vsel %vm70, %v790, 0
    %v895 = vsel %vm70, %v791, 0
    %v898 = vsel %vm70, %v792, 0
    %900 = vmatprep.subr.mxu0 0.0
    %901 = vmatpush1.msra.mxu0 %v793
    %902 = vmatprep.subr.mxu0 0.0
    %903 = vmatpush1.msra.mxu0 %v794
    %904 = vmatprep.subr.mxu0 0.0
    %905 = vmatpush1.msra.mxu0 %v795
    %906 = vmatprep.subr.mxu0 0.0
    %907 = vmatpush1.msra.mxu0 %v796
    %908 = vmatprep.subr.mxu0 0.0
    %909 = vmatpush1.msra.mxu0 0.0
    %910 = vmatprep.subr.mxu0 0.0
    %911 = vmatpush1.msra.mxu0 0.0
    %912 = vmatprep.subr.mxu0 0.0
    %913 = vmatpush1.msra.mxu0 0.0
    %914 = vmatprep.subr.mxu0 0.0
    %915 = vmatpush1.msra.mxu0 0.0
    %916 = vmatprep.subr.mxu0 0.0
    %917 = vmatpush1.msra.mxu0 0.0
    %918 = vmatprep.subr.mxu0 0.0
    %919 = vmatpush1.msra.mxu0 0.0
    %920 = vmatprep.subr.mxu0 0.0
    %921 = vmatpush1.msra.mxu0 0.0
    %922 = vmatprep.subr.mxu0 0.0
    %923 = vmatpush1.msra.mxu0 0.0
    %924 = vmatprep.subr.mxu0 0.0
    %925 = vmatpush1.msra.mxu0 0.0
    %926 = vmatprep.subr.mxu0 0.0
    %927 = vmatpush1.msra.mxu0 0.0
    %928 = vmatprep.subr.mxu0 0.0
    %929 = vmatpush1.msra.mxu0 0.0
    %930 = vmatprep.subr.mxu0 0.0
    %931 = vmatpush1.msra.mxu0 0.0
    %932 = vmatprep.subr.mxu0 0.0
    %933 = vmatpush1.msra.mxu0 0.0
    %934 = vmatprep.subr.mxu0 0.0
    %935 = vmatpush1.msra.mxu0 0.0
    %936 = vmatprep.subr.mxu0 0.0
    %937 = vmatpush1.msra.mxu0 0.0
    %938 = vmatprep.subr.mxu0 0.0
    %939 = vmatpush1.msra.mxu0 0.0
    %940 = vmatprep.subr.mxu0 0.0
    %941 = vmatpush1.msra.mxu0 0.0
    %942 = vmatprep.subr.mxu0 0.0
    %943 = vmatpush1.msra.mxu0 0.0
    %944 = vmatprep.subr.mxu0 0.0
    %945 = vmatpush1.msra.mxu0 0.0
    %946 = vmatprep.subr.mxu0 0.0
    %947 = vmatpush1.msra.mxu0 0.0
    %948 = vmatprep.subr.mxu0 0.0
    %949 = vmatpush1.msra.mxu0 0.0
    %950 = vmatprep.subr.mxu0 0.0
    %951 = vmatpush1.msra.mxu0 0.0
    %952 = vmatprep.subr.mxu0 0.0
    %953 = vmatpush1.msra.mxu0 0.0
    %954 = vmatprep.subr.mxu0 0.0
    %955 = vmatpush1.msra.mxu0 0.0
    %956 = vmatprep.subr.mxu0 0.0
    %957 = vmatpush1.msra.mxu0 0.0
    %958 = vmatprep.subr.mxu0 0.0
    %959 = vmatpush1.msra.mxu0 0.0
    %960 = vmatprep.subr.mxu0 0.0
    %961 = vmatpush1.msra.mxu0 0.0
    %962 = vmatprep.subr.mxu0 0.0
    %963 = vmatpush1.msra.mxu0 0.0
    %964 = vmatprep.mubr.f32.mxu0 0.0
    %965 = vmatmul.mubr.f32.gmra.mrb[0].mxu0 %v805
    %v966 = vpop.f32.mrb[0].mxu0
    %v967 = vadd.f32 %v802, %v966
    %v968 = vpop.f32.mrb[0].mxu0
    %969 = vmatprep.mubr.f32.mxu0 0.0
    %970 = vmatmul.mubr.f32.gmra.mrb[0].mxu0 %v808
    %v971 = vpop.f32.mrb[0].mxu0
    %v972 = vadd.f32 %v802, %v971
    %v973 = vpop.f32.mrb[0].mxu0
    %974 = vmatprep.mubr.f32.mxu0 0.0
    %975 = vmatmul.mubr.f32.gmra.mrb[0].mxu0 %v811
    %v976 = vpop.f32.mrb[0].mxu0
    %v977 = vadd.f32 %v802, %v976
    %v978 = vpop.f32.mrb[0].mxu0
    %979 = vmatprep.mubr.f32.mxu0 0.0
    %980 = vmatmul.mubr.f32.gmra.mrb[0].mxu0 %v814
    %v981 = vpop.f32.mrb[0].mxu0
    %v982 = vadd.f32 %v802, %v981
    %v983 = vpop.f32.mrb[0].mxu0
    %984 = vmatprep.mubr.f32.mxu0 0.0
    %985 = vmatmul.mubr.f32.gmra.mrb[0].mxu0 %v817
    %v986 = vpop.f32.mrb[0].mxu0
    %v987 = vadd.f32 %v802, %v986
    %v988 = vpop.f32.mrb[0].mxu0
    %989 = vmatprep.mubr.f32.mxu0 0.0
    %990 = vmatmul.mubr.f32.gmra.mrb[0].mxu0 %v820
    %v991 = vpop.f32.mrb[0].mxu0
    %v992 = vadd.f32 %v802, %v991
    %v993 = vpop.f32.mrb[0].mxu0
    %994 = vmatprep.mubr.f32.mxu0 0.0
    %995 = vmatmul.mubr.f32.gmra.mrb[0].mxu0 %v823
    %v996 = vpop.f32.mrb[0].mxu0
    %v997 = vadd.f32 %v802, %v996
    %v998 = vpop.f32.mrb[0].mxu0
    %999 = vmatprep.mubr.f32.mxu0 0.0
    %1000 = vmatmul.mubr.f32.gmra.mrb[0].mxu0 %v826
    %v1001 = vpop.f32.mrb[0].mxu0
    %v1002 = vadd.f32 %v802, %v1001
    %v1003 = vpop.f32.mrb[0].mxu0
    %1004 = vmatprep.mubr.f32.mxu0 0.0
    %1005 = vmatmul.mubr.f32.gmra.mrb[0].mxu0 %v829
    %v1006 = vpop.f32.mrb[0].mxu0
    %v1007 = vadd.f32 %v802, %v1006
    %v1008 = vpop.f32.mrb[0].mxu0
    %1009 = vmatprep.mubr.f32.mxu0 0.0
    %1010 = vmatmul.mubr.f32.gmra.mrb[0].mxu0 %v832
    %v1011 = vpop.f32.mrb[0].mxu0
    %v1012 = vadd.f32 %v802, %v1011
    %v1013 = vpop.f32.mrb[0].mxu0
    %1014 = vmatprep.mubr.f32.mxu0 0.0
    %1015 = vmatmul.mubr.f32.gmra.mrb[0].mxu0 %v835
    %v1016 = vpop.f32.mrb[0].mxu0
    %v1017 = vadd.f32 %v802, %v1016
    %v1018 = vpop.f32.mrb[0].mxu0
    %1019 = vmatprep.mubr.f32.mxu0 0.0
    %1020 = vmatmul.mubr.f32.gmra.mrb[0].mxu0 %v838
    %v1021 = vpop.f32.mrb[0].mxu0
    %v1022 = vadd.f32 %v802, %v1021
    %v1023 = vpop.f32.mrb[0].mxu0
    %1024 = vmatprep.mubr.f32.mxu0 0.0
    %1025 = vmatmul.mubr.f32.gmra.mrb[0].mxu0 %v841
    %v1026 = vpop.f32.mrb[0].mxu0
    %v1027 = vadd.f32 %v802, %v1026
    %v1028 = vpop.f32.mrb[0].mxu0
    %1029 = vmatprep.mubr.f32.mxu0 0.0
    %1030 = vmatmul.mubr.f32.gmra.mrb[0].mxu0 %v844
    %v1031 = vpop.f32.mrb[0].mxu0
    %v1032 = vadd.f32 %v802, %v1031
    %v1033 = vpop.f32.mrb[0].mxu0
    %1034 = vmatprep.mubr.f32.mxu0 0.0
    %1035 = vmatmul.mubr.f32.gmra.mrb[0].mxu0 %v847
    %v1036 = vpop.f32.mrb[0].mxu0
    %v1037 = vadd.f32 %v802, %v1036
    %v1038 = vpop.f32.mrb[0].mxu0
    %1039 = vmatprep.mubr.f32.mxu0 0.0
    %1040 = vmatmul.mubr.f32.gmra.mrb[0].mxu0 %v850
    %v1041 = vpop.f32.mrb[0].mxu0
    %v1042 = vadd.f32 %v802, %v1041
    %v1043 = vpop.f32.mrb[0].mxu0
    %1044 = vmatprep.mubr.f32.mxu0 0.0
    %1045 = vmatmul.mubr.f32.gmra.mrb[0].mxu0 %v853
    %v1046 = vpop.f32.mrb[0].mxu0
    %v1047 = vadd.f32 %v802, %v1046
    %v1048 = vpop.f32.mrb[0].mxu0
    %1049 = vmatprep.mubr.f32.mxu0 0.0
    %1050 = vmatmul.mubr.f32.gmra.mrb[0].mxu0 %v856
    %v1051 = vpop.f32.mrb[0].mxu0
    %v1052 = vadd.f32 %v802, %v1051
    %v1053 = vpop.f32.mrb[0].mxu0
    %1054 = vmatprep.mubr.f32.mxu0 0.0
    %1055 = vmatmul.mubr.f32.gmra.mrb[0].mxu0 %v859
    %v1056 = vpop.f32.mrb[0].mxu0
    %v1057 = vadd.f32 %v802, %v1056
    %v1058 = vpop.f32.mrb[0].mxu0
    %1059 = vmatprep.mubr.f32.mxu0 0.0
    %1060 = vmatmul.mubr.f32.gmra.mrb[0].mxu0 %v862
    %v1061 = vpop.f32.mrb[0].mxu0
    %v1062 = vadd.f32 %v802, %v1061
    %v1063 = vpop.f32.mrb[0].mxu0
    %1064 = vmatprep.mubr.f32.mxu0 0.0
    %1065 = vmatmul.mubr.f32.gmra.mrb[0].mxu0 %v865
    %v1066 = vpop.f32.mrb[0].mxu0
    %v1067 = vadd.f32 %v802, %v1066
    %v1068 = vpop.f32.mrb[0].mxu0
    %1069 = vmatprep.mubr.f32.mxu0 0.0
    %1070 = vmatmul.mubr.f32.gmra.mrb[0].mxu0 %v868
    %v1071 = vpop.f32.mrb[0].mxu0
    %v1072 = vadd.f32 %v802, %v1071
    %v1073 = vpop.f32.mrb[0].mxu0
    %1074 = vmatprep.mubr.f32.mxu0 0.0
    %1075 = vmatmul.mubr.f32.gmra.mrb[0].mxu0 %v871
    %v1076 = vpop.f32.mrb[0].mxu0
    %v1077 = vadd.f32 %v802, %v1076
    %v1078 = vpop.f32.mrb[0].mxu0
    %1079 = vmatprep.mubr.f32.mxu0 0.0
    %1080 = vmatmul.mubr.f32.gmra.mrb[0].mxu0 %v874
    %v1081 = vpop.f32.mrb[0].mxu0
    %v1082 = vadd.f32 %v802, %v1081
    %v1083 = vpop.f32.mrb[0].mxu0
    %1084 = vmatprep.mubr.f32.mxu0 0.0
    %1085 = vmatmul.mubr.f32.gmra.mrb[0].mxu0 %v877
    %v1086 = vpop.f32.mrb[0].mxu0
    %v1087 = vadd.f32 %v802, %v1086
    %v1088 = vpop.f32.mrb[0].mxu0
    %1089 = vmatprep.mubr.f32.mxu0 0.0
    %1090 = vmatmul.mubr.f32.gmra.mrb[0].mxu0 %v880
    %v1091 = vpop.f32.mrb[0].mxu0
    %v1092 = vadd.f32 %v802, %v1091
    %v1093 = vpop.f32.mrb[0].mxu0
    %1094 = vmatprep.mubr.f32.mxu0 0.0
    %1095 = vmatmul.mubr.f32.gmra.mrb[0].mxu0 %v883
    %v1096 = vpop.f32.mrb[0].mxu0
    %v1097 = vadd.f32 %v802, %v1096
    %v1098 = vpop.f32.mrb[0].mxu0
    %1099 = vmatprep.mubr.f32.mxu0 0.0
    %1100 = vmatmul.mubr.f32.gmra.mrb[0].mxu0 %v886
    %v1101 = vpop.f32.mrb[0].mxu0
    %v1102 = vadd.f32 %v802, %v1101
    %v1103 = vpop.f32.mrb[0].mxu0
    %1104 = vmatprep.mubr.f32.mxu0 0.0
    %1105 = vmatmul.mubr.f32.gmra.mrb[0].mxu0 %v889
    %v1106 = vpop.f32.mrb[0].mxu0
    %v1107 = vadd.f32 %v802, %v1106
    %v1108 = vpop.f32.mrb[0].mxu0
    %1109 = vmatprep.mubr.f32.mxu0 0.0
    %1110 = vmatmul.mubr.f32.gmra.mrb[0].mxu0 %v892
    %v1111 = vpop.f32.mrb[0].mxu0
    %v1112 = vadd.f32 %v802, %v1111
    %v1113 = vpop.f32.mrb[0].mxu0
    %1114 = vmatprep.mubr.f32.mxu0 0.0
    %1115 = vmatmul.mubr.f32.gmra.mrb[0].mxu0 %v895
    %v1116 = vpop.f32.mrb[0].mxu0
    %v1117 = vadd.f32 %v802, %v1116
    %v1118 = vpop.f32.mrb[0].mxu0
    %1119 = vmatprep.mubr.f32.mxu0 0.0
    %1120 = vmatmul.mubr.f32.gmra.mrb[0].mxu0 %v898
    %v1121 = vpop.f32.mrb[0].mxu0
    %v1122 = vadd.f32 %v802, %v1121
    %v1123 = vpop.f32.mrb[0].mxu0
    %1124 = vdwg.mxu0
    %v1125 = vtanh.pop %v967
    %v1126 = vtanh.pop %v972
    %v1127 = vtanh.pop %v977
    %v1128 = vtanh.pop %v982
    %v1129 = vtanh.pop %v987
    %v1130 = vtanh.pop %v992
    %v1131 = vtanh.pop %v997
    %v1132 = vtanh.pop %v1002
    %v1133 = vtanh.pop %v1007
    %v1134 = vtanh.pop %v1012
    %v1135 = vtanh.pop %v1017
    %v1136 = vtanh.pop %v1022
    %v1137 = vtanh.pop %v1027
    %v1138 = vtanh.pop %v1032
    %v1139 = vtanh.pop %v1037
    %v1140 = vtanh.pop %v1042
    %v1141 = vtanh.pop %v1047
    %v1142 = vtanh.pop %v1052
    %v1143 = vtanh.pop %v1057
    %v1144 = vtanh.pop %v1062
    %v1145 = vtanh.pop %v1067
    %v1146 = vtanh.pop %v1072
    %v1147 = vtanh.pop %v1077
    %v1148 = vtanh.pop %v1082
    %v1149 = vtanh.pop %v1087
    %v1150 = vtanh.pop %v1092
    %v1151 = vtanh.pop %v1097
    %v1152 = vtanh.pop %v1102
    %v1153 = vtanh.pop %v1107
    %v1154 = vtanh.pop %v1112
    %v1155 = vtanh.pop %v1117
    %v1156 = vtanh.pop %v1122
    %1157 = vst [vmem:[#allocation2] sm:$0xff] %v1125
    %1158 = vst [vmem:[#allocation2 + $0x8] sm:$0xff] %v1126
    %1159 = vst [vmem:[#allocation2 + $0x10] sm:$0xff] %v1127
    %1160 = vst [vmem:[#allocation2 + $0x18] sm:$0xff] %v1128
    %1161 = vst [vmem:[#allocation2 + $0x20] sm:$0xff] %v1129
    %1162 = vst [vmem:[#allocation2 + $0x28] sm:$0xff] %v1130
    %1163 = vst [vmem:[#allocation2 + $0x30] sm:$0xff] %v1131
    %1164 = vst [vmem:[#allocation2 + $0x38] sm:$0xff] %v1132
    %1165 = vst [vmem:[#allocation2 + $0x40] sm:$0xff] %v1133
    %1166 = vst [vmem:[#allocation2 + $0x48] sm:$0xff] %v1134
    %1167 = vst [vmem:[#allocation2 + $0x50] sm:$0xff] %v1135
    %1168 = vst [vmem:[#allocation2 + $0x58] sm:$0xff] %v1136
    %1169 = vst [vmem:[#allocation2 + $0x60] sm:$0xff] %v1137
    %1170 = vst [vmem:[#allocation2 + $0x68] sm:$0xff] %v1138
    %1171 = vst [vmem:[#allocation2 + $0x70] sm:$0xff] %v1139
    %1172 = vst [vmem:[#allocation2 + $0x78] sm:$0xff] %v1140
    %1173 = vst [vmem:[#allocation2 + $0x80] sm:$0xff] %v1141
    %1174 = vst [vmem:[#allocation2 + $0x88] sm:$0xff] %v1142
    %1175 = vst [vmem:[#allocation2 + $0x90] sm:$0xff] %v1143
    %1176 = vst [vmem:[#allocation2 + $0x98] sm:$0xff] %v1144
    %1177 = vst [vmem:[#allocation2 + $0xa0] sm:$0xff] %v1145
    %1178 = vst [vmem:[#allocation2 + $0xa8] sm:$0xff] %v1146
    %1179 = vst [vmem:[#allocation2 + $0xb0] sm:$0xff] %v1147
    %1180 = vst [vmem:[#allocation2 + $0xb8] sm:$0xff] %v1148
    %1181 = vst [vmem:[#allocation2 + $0xc0] sm:$0xff] %v1149
    %1182 = vst [vmem:[#allocation2 + $0xc8] sm:$0xff] %v1150
    %1183 = vst [vmem:[#allocation2 + $0xd0] sm:$0xff] %v1151
    %1184 = vst [vmem:[#allocation2 + $0xd8] sm:$0xff] %v1152
    %1185 = vst [vmem:[#allocation2 + $0xe0] sm:$0xff] %v1153
    %1186 = vst [vmem:[#allocation2 + $0xe8] sm:$0xff] %v1154
    %1187 = vst [vmem:[#allocation2 + $0xf0] sm:$0xff] %v1155
    %1188 = vst [vmem:[#allocation2 + $0xf8] sm:$0xff] %v1156
    // Predicated region
    $region30: #{tpu_custom_call.1} parent=1 // pred_check
      _
    $region31: #{tpu_custom_call.1} parent=1 // pred_check_branch
      %1190 = sbr.rel (0) target = $region33
    $region32: #{tpu_custom_call.1} parent=1 // pred_region
      %s1192 = ssub.s32 4096, 4096
      %1193 = vsyncadd [#allocation3], %s1192
      %s1194 = sshll.u32 [#allocation2], 4
      %s1195 = int_to_ptr.vmem [resolvable:$true] %s1194
      %1200 = dma.vmem_to_hbm [thread:$0]  %s1195, 4096, %s7, [#allocation3], 128, 128, 8
    $region33: #{tpu_custom_call.1} parent=1 // pred_fallthru
      _
    // Predicated region
    $region34: #{tpu_custom_call.1} parent=1 // pred_check
      _
    $region35: #{tpu_custom_call.1} parent=1 // pred_check_branch
      %1202 = sbr.rel (0) target = $region37
    $region36: #{tpu_custom_call.1} parent=1 // pred_region
      %1203 = dma.done [#allocation3], 4096
    $region37: #{tpu_custom_call.1} parent=1 // pred_fallthru
      _
    %1204 = vsyncpa [#allocation3], 1

</llo_original>
